<compile_context>
chip_gen: v7x
topology: tpu7x:2x2x1
jax: 0.10.0
libtpu: 0.0.40
codegen_flags: <defaults>
</compile_context>

<pallas_src>
import functools

import jax
import jax.numpy as jnp
from jax import lax
from jax.experimental import pallas as pl
from jax.experimental.pallas import tpu as pltpu


_BLOCK_BATCH_CAP = 1024


def _cdiv(a, b):
    return (a + b - 1) // b


def _round_up(a, m):
    return ((a + m - 1) // m) * m


def _min_sublane(dtype):
    # Sublane packing minimum: 8 rows for 4-byte, 16 for 2-byte, 32 for 1-byte.
    itemsize = jnp.dtype(dtype).itemsize
    return max(8, 32 // itemsize)


def _tpu_params():
    """Best-effort generation query: (per-core VMEM bytes, TensorCores/chip)."""
    vmem_bytes = 128 * 1024 * 1024  # v5e/v6e default; v7x reports 64 MiB.
    num_cores = 1
    try:
        info = pltpu.get_tpu_info()
        vmem_bytes = int(getattr(info, "vmem_capacity_bytes", vmem_bytes))
        num_cores = int(getattr(info, "num_cores",
                                getattr(info, "tensorcore_count", num_cores)))
    except Exception:
        pass
    return vmem_bytes, num_cores


def _normalize_kernel(x_ref, o_ref, *, power):
    # x_ref / o_ref view: [block_batch, dim]; compute in f32.
    x = x_ref[...].astype(jnp.float32)
    if power == 2:
        # L2 fast path (module default): rsqrt goes to the EUP slot.
        sq_sum = jnp.sum(x * x, axis=1, keepdims=True)
        out = x * lax.rsqrt(sq_sum)
    else:
        if isinstance(power, int):
            # integer_pow -> a couple of vmuls instead of an exp/log chain.
            pow_sum = jnp.sum(lax.integer_pow(x, power), axis=1, keepdims=True)
        else:
            pow_sum = jnp.sum(jnp.power(x, power), axis=1, keepdims=True)
        # Inverse norm directly: one EUP exp/log chain on a [block,1] column,
        # no approx reciprocal error.
        out = x * jnp.power(pow_sum, -1.0 / power)
    o_ref[...] = out.astype(o_ref.dtype)


def _choose_block_batch(batch, dim, dtype, vmem_limit_bytes, num_cores):
    sub = _min_sublane(dtype)
    itemsize = jnp.dtype(dtype).itemsize
    # Per-row VMEM: in + out tiles at input dtype, double-buffered, plus the
    # f32 working set inside the body (upcast copy + pre-cast output temp).
    tile_row_bytes = dim * itemsize * 2 * 2
    work_row_bytes = dim * 4 * 2
    row_bytes = tile_row_bytes + work_row_bytes
    budget = int(vmem_limit_bytes * 0.75)  # leave pipeline/compiler headroom
    block = max(sub, (budget // row_bytes) // sub * sub)
    block = min(block, _BLOCK_BATCH_CAP)

    padded = _round_up(batch, sub)
    if block >= padded:
        block = padded

    # Only on multi-TensorCore parts (v7x): keep the grid-step count even so
    # both cores split the HBM traffic. Single-TC v5e/v6e skip the extra steps.
    if num_cores > 1 and batch > sub:
        steps = _cdiv(batch, block)
        if steps % 2 != 0:
            block = max(sub, _round_up(_cdiv(batch, steps + 1), sub))
    return block


def normalize(x, power=2, block_batch=None):
    """L-p normalize along axis 1 (matches torch Normalize.forward)."""
    assert x.ndim == 2, "layout: [batch, dim]"
    batch, dim = x.shape
    sub = _min_sublane(x.dtype)

    vmem_bytes, num_cores = _tpu_params()
    # Scoped VMEM limit: half of physical (32 MiB on v7x, 64 MiB on v5e/v6e).
    vmem_limit = int(min(64 * 1024 * 1024,
                         max(32 * 1024 * 1024, vmem_bytes // 2)))

    if block_batch is None:
        block_batch = _choose_block_batch(batch, dim, x.dtype, vmem_limit,
                                          num_cores)
    else:
        block_batch = _round_up(block_batch, sub)

    # No host-side pad/slice: ceil-div grid; Pallas masks the ragged last
    # block (garbage OOB input rows are row-independent, OOB output rows are
    # never written back to HBM).
    grid = (_cdiv(batch, block_batch),)

    # TODO(synk): for very large dim (tens of thousands) switch to a two-pass /
    # accumulator pattern over an "arbitrary" dim-grid axis instead of
    # whole-dim tiles; whole-dim tiles are fine for typical feature widths.

    kernel = functools.partial(_normalize_kernel, power=power)
    out = pl.pallas_call(
        kernel,
        out_shape=jax.ShapeDtypeStruct((batch, dim), x.dtype),
        grid_spec=pltpu.PrefetchScalarGridSpec(
            num_scalar_prefetch=0,
            grid=grid,
            in_specs=[pl.BlockSpec((block_batch, dim), lambda i: (i, 0))],
            out_specs=pl.BlockSpec((block_batch, dim), lambda i: (i, 0)),
        ),
        compiler_params=pltpu.CompilerParams(
            dimension_semantics=("parallel",),
            vmem_limit_bytes=vmem_limit,
        ),
    )(x)
    return out


def normalize_ref(x, power=2):
    """Pure-JAX reference mirroring the PyTorch forward (in f32)."""
    xf = x.astype(jnp.float32)
    norm = jnp.power(jnp.sum(jnp.power(xf, power), axis=1, keepdims=True),
                     1.0 / power)
    return (xf / norm).astype(x.dtype)


if __name__ == "__main__":
    key = jax.random.PRNGKey(0)

    # 1) Default path: power=2, f32, aligned batch.
    batch, dim = 8, 128
    x = jax.random.normal(key, (batch, dim), dtype=jnp.float32)
    out = jax.block_until_ready(normalize(x, power=2))
    ref = normalize_ref(x, power=2)
    assert out.shape == x.shape and out.dtype == x.dtype
    assert jnp.allclose(out, ref, atol=1e-4, rtol=1e-4), "mismatch (f32, p=2)"

    # 2) Ragged batch (no host pad/slice), bf16 input, single partial block.
    k2 = jax.random.PRNGKey(1)
    x2 = jax.random.normal(k2, (10, 256), dtype=jnp.bfloat16)
    out2 = jax.block_until_ready(normalize(x2, power=2))
    ref2 = normalize_ref(x2, power=2)
    assert out2.shape == x2.shape and out2.dtype == x2.dtype
    assert jnp.allclose(out2.astype(jnp.float32), ref2.astype(jnp.float32),
                        atol=3e-2, rtol=3e-2), "mismatch (bf16, p=2)"

    # 3) Ragged multi-step grid: forced small block so the last block is partial.
    k3 = jax.random.PRNGKey(2)
    x3 = jax.random.normal(k3, (20, 128), dtype=jnp.float32)
    out3 = jax.block_until_ready(normalize(x3, power=2, block_batch=8))
    ref3 = normalize_ref(x3, power=2)
    assert out3.shape == x3.shape
    assert jnp.allclose(out3, ref3, atol=1e-4, rtol=1e-4), "mismatch (ragged grid)"

    # 4) General power path (integer p=3), positive inputs so the root is real.
    k4 = jax.random.PRNGKey(3)
    x4 = jnp.abs(jax.random.normal(k4, (8, 128), dtype=jnp.float32)) + 0.1
    out4 = jax.block_until_ready(normalize(x4, power=3))
    ref4 = normalize_ref(x4, power=3)
    assert jnp.allclose(out4, ref4, atol=5e-3, rtol=5e-3), "mismatch (f32, p=3)"

    print("KERNEL_OK")
</pallas_src>

<mosaic_0001>
module attributes {stable_mosaic.version = 11 : i64} {
  func.func @_normalize_kernel(%arg0: i32, %arg1: memref<8x128xf32, #tpu.memory_space<vmem>>, %arg2: memref<8x128xf32, #tpu.memory_space<vmem>>) attributes {dimension_semantics = [#tpu.dimension_semantics<parallel>], iteration_bounds = array<i64: 1>, scalar_prefetch = 0 : i64, scratch_operands = 0 : i64, tpu.core_type = #tpu.core_type<tc>, window_params = [{transform_indices = @transform_0, window_bounds = array<i64: 8, 128>}, {transform_indices = @transform_1, window_bounds = array<i64: 8, 128>}]} {
    %c0 = arith.constant 0 : index
    %c0_0 = arith.constant 0 : index
    %0 = vector.load %arg1[%c0, %c0_0] : memref<8x128xf32, #tpu.memory_space<vmem>>, vector<8x128xf32>
    %1 = arith.mulf %0, %0 : vector<8x128xf32>
    %cst = arith.constant dense<0.000000e+00> : vector<8xf32>
    %2 = vector.multi_reduction <add>, %1, %cst [1] : vector<8x128xf32> to vector<8xf32>
    %3 = vector.shape_cast %2 : vector<8xf32> to vector<8x1xf32>
    %4 = math.rsqrt %3 : vector<8x1xf32>
    %5 = vector.broadcast %4 : vector<8x1xf32> to vector<8x128xf32>
    %6 = arith.mulf %0, %5 : vector<8x128xf32>
    %c0_1 = arith.constant 0 : index
    %c0_2 = arith.constant 0 : index
    %7 = vector.load %arg2[%c0_1, %c0_2] : memref<8x128xf32, #tpu.memory_space<vmem>>, vector<8x128xf32>
    tpu.vector_store %arg2[%c0_1, %c0_2], %6 {strides = array<i32>} : memref<8x128xf32, #tpu.memory_space<vmem>>, vector<8x128xf32>,
    return
  }
  func.func @transform_0(%arg0: i32) -> (i32, i32) {
    %c0_i32 = arith.constant 0 : i32
    %c0_i32_0 = arith.constant 0 : i32
    return %arg0, %c0_i32 : i32, i32
  }
  func.func @transform_1(%arg0: i32) -> (i32, i32) {
    %c0_i32 = arith.constant 0 : i32
    %c0_i32_0 = arith.constant 0 : i32
    return %arg0, %c0_i32 : i32, i32
  }
}

</mosaic_0001>

<llo_original>
// kernel: tpu_custom_call.1
$region0: #{tpu_custom_call.1}
  #allocation0 [shape = 'u32[]', space=smem, size = 0x4, offset = 0x4, fixed_abs, tag = 'smem constant byte address 0x4 - core index']
  #allocation1 [shape = 'u32[144,128]{1,0:T(1,128)}', space=vmem, size = 0x12000, scoped, tag = 'internal scratch']
  %s0 = inlined_call_operand.hbm [shape: f32[8,128], index: 0, kind: input, shape index: {}]
  %s1 = inlined_call_operand.hbm [shape: f32[8,128], index: 1, kind: output, shape index: {}]
  %s2 = sld [smem:[#allocation0]]
  $region18: #{tpu_custom_call.1} parent=0
    _
  %s4 = ssub.s32 1, %s2
  %s5 = scalar_select 0, %s4, %s2
  $region1: #{tpu_custom_call.1} parent=0
    #allocation2 [shape = 'u8[4096]{0}', space=vmem, size = 0x1000, scoped, tag = 'input window, operand 0, single buffered']
    #allocation3 [shape = 's32[1]{0}', space=sflag, size = 0x4, scoped, tag = 'scoped memory for tpu_custom_call.1']
    #allocation4 [shape = 's32[1]{0}', space=sflag, size = 0x4, scoped, tag = 'scoped memory for tpu_custom_call.1']
    #allocation5 [shape = 'u8[4096]{0}', space=vmem, size = 0x1000, scoped, tag = 'output window, operand 0, single buffered']
    %6 = vsyncpa [#allocation3], 0
    %7 = vsyncpa [#allocation4], 0
    // Predicated region
    $region2: #{tpu_custom_call.1} parent=1 // pred_check
      _
    $region3: #{tpu_custom_call.1} parent=1 // pred_check_branch
      %9 = sbr.rel (0) target = $region5
    $region4: #{tpu_custom_call.1} parent=1 // pred_region
      %s11 = ssub.s32 128, 128
      %12 = vsyncadd [#allocation3], %s11
      %s14 = sshll.u32 [#allocation2], 4
      %s15 = int_to_ptr.vmem [resolvable:$true] %s14
      %17 = dma.hbm_to_vmem [thread:$0]  %s0, 128, %s15, [#allocation3]
    $region5: #{tpu_custom_call.1} parent=1 // pred_fallthru
      _
    // Predicated region
    $region6: #{tpu_custom_call.1} parent=1 // pred_check
      _
    $region7: #{tpu_custom_call.1} parent=1 // pred_check_branch
      %19 = sbr.rel (0) target = $region9
    $region8: #{tpu_custom_call.1} parent=1 // pred_region
      %20 = dma.done [#allocation3], 128
    $region9: #{tpu_custom_call.1} parent=1 // pred_fallthru
      _
    %v21 = vld [vmem:[#allocation2] sm:$0xff]
    %v22 = vmul.f32 %v21, %v21
    %23 = vadd.xlane.f32.xlu0 %v22
    %v24 = vpop.xlane.xlu0 %23
    %v25 = vrsqrt.pop %v24
    %v26 = vmul.f32 %v21, %v25
    %27 = vst [vmem:[#allocation5] sm:$0xff] %v26
    // Predicated region
    $region10: #{tpu_custom_call.1} parent=1 // pred_check
      _
    $region11: #{tpu_custom_call.1} parent=1 // pred_check_branch
      %29 = sbr.rel (0) target = $region13
    $region12: #{tpu_custom_call.1} parent=1 // pred_region
      %s31 = ssub.s32 128, 128
      %32 = vsyncadd [#allocation4], %s31
      %s34 = sshll.u32 [#allocation5], 4
      %s35 = int_to_ptr.vmem [resolvable:$true] %s34
      %37 = dma.vmem_to_hbm [thread:$0]  %s35, 128, %s1, [#allocation4]
    $region13: #{tpu_custom_call.1} parent=1 // pred_fallthru
      _
    // Predicated region
    $region14: #{tpu_custom_call.1} parent=1 // pred_check
      _
    $region15: #{tpu_custom_call.1} parent=1 // pred_check_branch
      %39 = sbr.rel (0) target = $region17
    $region16: #{tpu_custom_call.1} parent=1 // pred_region
      %40 = dma.done [#allocation4], 128
    $region17: #{tpu_custom_call.1} parent=1 // pred_fallthru
      _
    %41 = vsyncpa [#allocation3], 1
    %42 = vsyncpa [#allocation4], 1

</llo_original>
